<compile_context>
chip_gen: v5e
topology: v5e:2x2
jax: 0.10.0
libtpu: 0.0.40
codegen_flags: <defaults>
</compile_context>

<pallas_src>
import jax
import jax.numpy as jnp
from jax.experimental import pallas as pl
from jax.experimental.pallas import tpu as pltpu


def _passthrough_kernel(z_ref, x_ref, z_out_ref, x_out_ref, sem):
    # Direct HBM->HBM DMA for each feature map.  Both copies are started
    # before either is waited on so the DMA engines overlap them.
    cp_z = pltpu.make_async_copy(z_ref, z_out_ref, sem.at[0])
    cp_x = pltpu.make_async_copy(x_ref, x_out_ref, sem.at[1])
    cp_z.start()
    cp_x.start()
    cp_z.wait()
    cp_x.wait()


def fcos_forward(z_f, x_f):
    """FCOS base-class forward: interface-only pass-through of (z_f, x_f).

    z_f: (N, C, Hz, Wz) NCHW template features
    x_f: (N, C, Hx, Wx) NCHW search features
    Returns (z_f, x_f) unchanged (the base class defines no computation).
    """
    z_out, x_out = pl.pallas_call(
        _passthrough_kernel,
        out_shape=(
            jax.ShapeDtypeStruct(z_f.shape, z_f.dtype),
            jax.ShapeDtypeStruct(x_f.shape, x_f.dtype),
        ),
        in_specs=[
            pl.BlockSpec(memory_space=pl.ANY),
            pl.BlockSpec(memory_space=pl.ANY),
        ],
        out_specs=(
            pl.BlockSpec(memory_space=pl.ANY),
            pl.BlockSpec(memory_space=pl.ANY),
        ),
        scratch_shapes=[pltpu.SemaphoreType.DMA((2,))],
    )(z_f, x_f)
    return z_out, x_out


if __name__ == "__main__":
    key = jax.random.PRNGKey(0)
    kz, kx = jax.random.split(key)

    # Small shapes consistent with a Siamese-tracking FCOS head:
    # template feature z_f and (larger) search feature x_f, NCHW.
    z_f = jax.random.normal(kz, (2, 4, 8, 8), dtype=jnp.float32)
    x_f = jax.random.normal(kx, (2, 4, 16, 16), dtype=jnp.float32)

    z_out, x_out = fcos_forward(z_f, x_f)
    jax.block_until_ready((z_out, x_out))

    assert z_out.shape == z_f.shape and x_out.shape == x_f.shape
    assert jnp.allclose(z_out, z_f) and jnp.allclose(x_out, x_f)

    print("KERNEL_OK")
</pallas_src>

<mosaic_0001>
module attributes {stable_mosaic.version = 11 : i64} {
  func.func @_passthrough_kernel(%arg0: memref<2x4x8x8xf32, #tpu.memory_space<any>>, %arg1: memref<2x4x16x16xf32, #tpu.memory_space<any>>, %arg2: memref<2x4x8x8xf32, #tpu.memory_space<any>>, %arg3: memref<2x4x16x16xf32, #tpu.memory_space<any>>, %arg4: memref<2x!tpu.dma_semaphore, #tpu.memory_space<semaphore_mem>>) attributes {dimension_semantics = [], scalar_prefetch = 0 : i64, scratch_operands = 1 : i64, tpu.core_type = #tpu.core_type<tc>} {
    %c0_i32 = arith.constant 0 : i32
    %0 = tpu.memref_slice %arg4[%c0_i32] : memref<2x!tpu.dma_semaphore, #tpu.memory_space<semaphore_mem>> -> memref<1x!tpu.dma_semaphore, #tpu.memory_space<semaphore_mem>>
    %1 = tpu.memref_squeeze %0 : memref<1x!tpu.dma_semaphore, #tpu.memory_space<semaphore_mem>> -> memref<!tpu.dma_semaphore, #tpu.memory_space<semaphore_mem>>
    tpu.enqueue_dma source(%arg0 : memref<2x4x8x8xf32, #tpu.memory_space<any>>) target(%arg2 : memref<2x4x8x8xf32, #tpu.memory_space<any>>) target_semaphore(%1 : memref<!tpu.dma_semaphore, #tpu.memory_space<semaphore_mem>>)
    %c1_i32 = arith.constant 1 : i32
    %2 = tpu.memref_slice %arg4[%c1_i32] : memref<2x!tpu.dma_semaphore, #tpu.memory_space<semaphore_mem>> -> memref<1x!tpu.dma_semaphore, #tpu.memory_space<semaphore_mem>>
    %3 = tpu.memref_squeeze %2 : memref<1x!tpu.dma_semaphore, #tpu.memory_space<semaphore_mem>> -> memref<!tpu.dma_semaphore, #tpu.memory_space<semaphore_mem>>
    tpu.enqueue_dma source(%arg1 : memref<2x4x16x16xf32, #tpu.memory_space<any>>) target(%arg3 : memref<2x4x16x16xf32, #tpu.memory_space<any>>) target_semaphore(%3 : memref<!tpu.dma_semaphore, #tpu.memory_space<semaphore_mem>>)
    %c0_i32_0 = arith.constant 0 : i32
    %4 = tpu.memref_slice %arg4[%c0_i32_0] : memref<2x!tpu.dma_semaphore, #tpu.memory_space<semaphore_mem>> -> memref<1x!tpu.dma_semaphore, #tpu.memory_space<semaphore_mem>>
    %5 = tpu.memref_squeeze %4 : memref<1x!tpu.dma_semaphore, #tpu.memory_space<semaphore_mem>> -> memref<!tpu.dma_semaphore, #tpu.memory_space<semaphore_mem>>
    tpu.wait_dma2 semaphore(%5 : memref<!tpu.dma_semaphore, #tpu.memory_space<semaphore_mem>>) src(%arg0 : memref<2x4x8x8xf32, #tpu.memory_space<any>>) dst(%arg2 : memref<2x4x8x8xf32, #tpu.memory_space<any>>)
    %c1_i32_1 = arith.constant 1 : i32
    %6 = tpu.memref_slice %arg4[%c1_i32_1] : memref<2x!tpu.dma_semaphore, #tpu.memory_space<semaphore_mem>> -> memref<1x!tpu.dma_semaphore, #tpu.memory_space<semaphore_mem>>
    %7 = tpu.memref_squeeze %6 : memref<1x!tpu.dma_semaphore, #tpu.memory_space<semaphore_mem>> -> memref<!tpu.dma_semaphore, #tpu.memory_space<semaphore_mem>>
    tpu.wait_dma2 semaphore(%7 : memref<!tpu.dma_semaphore, #tpu.memory_space<semaphore_mem>>) src(%arg1 : memref<2x4x16x16xf32, #tpu.memory_space<any>>) dst(%arg3 : memref<2x4x16x16xf32, #tpu.memory_space<any>>)
    return
  }
}

</mosaic_0001>

<llo_original>
// kernel: tpu_custom_call.1
$region0: #{tpu_custom_call.1}
  #allocation0 [shape = 'u32[]', space=smem, size = 0x4, offset = 0x4, fixed_abs, tag = 'smem constant byte address 0x4 - core index']
  #allocation1 [shape = 'u32[72,128]{1,0:T(1,128)}', space=vmem, size = 0x9000, scoped, tag = 'internal scratch']
  #allocation2 [shape = 's32[2]{0}', space=sflag, size = 0x8, scoped, tag = 'scratch operand']
  #allocation3 [shape = 's32[]', space=sflag, size = 0x4, offset = 0, fixed_abs, tag = 'sflag constant byte address 0x0 - dummy sync flag']
  #allocation4 [shape = 'u32[0]{0}', space=smem, size = 0, offset = 0, fixed_abs, tag = 'smem constant byte address 0x0 - null']
  #allocation5 [shape = 's32[]', space=sflag, size = 0x4, offset = 0, fixed_abs, tag = 'sflag constant byte address 0x0 - dummy sync flag']
  #allocation6 [shape = 'u32[0]{0}', space=smem, size = 0, offset = 0, fixed_abs, tag = 'smem constant byte address 0x0 - null']
  %s0 = inlined_call_operand.hbm [shape: f32[2,4,8,8], index: 0, kind: input, shape index: {}]
  %s1 = inlined_call_operand.hbm [shape: f32[2,4,16,16], index: 1, kind: input, shape index: {}]
  %s2 = inlined_call_operand.hbm [shape: f32[2,4,8,8], index: 2, kind: output, shape index: {0}]
  %s3 = inlined_call_operand.hbm [shape: f32[2,4,16,16], index: 3, kind: output, shape index: {1}]
  %4 = xla_tuple %s2, %s3
  %s5 = sld [smem:[#allocation0]]
  $region2: #{tpu_custom_call.1} parent=0
    _
  %s7 = ssub.s32 1, %s5
  %s8 = scalar_select 0, %s7, %s5
  %s10 = sshll.u32 1, 14
  %s11 = sxor.u32 4294967295, %s10
  %s13 = sshll.u32 %s0, 4
  %s14 = int_to_ptr.hbm [resolvable:$true] %s13
  %s15 = sshll.u32 %s2, 4
  %s16 = int_to_ptr.hbm [resolvable:$true] %s15
  %19 = dma.general %s14, 1024, %s16, [#allocation2], [#allocation3], [#allocation4], 0, 0
  %s20 = scalar_lea.sflag [#allocation2], 1
  %s22 = sshll.u32 1, 14
  %s23 = sxor.u32 4294967295, %s22
  %s25 = sshll.u32 %s1, 4
  %s26 = int_to_ptr.hbm [resolvable:$true] %s25
  %s27 = sshll.u32 %s3, 4
  %s28 = int_to_ptr.hbm [resolvable:$true] %s27
  %31 = dma.general %s26, 2048, %s28, %s20, [#allocation5], [#allocation6], 0, 0
  %s32 = smul.u32 2, 4
  %s33 = smul.u32 %s32, 8
  %s34 = smul.u32 %s33, 1
  %s35 = sshll.u32 %s34, 4
  %36 = dma.done [#allocation2], %s35
  %s37 = smul.u32 %s32, 16
  %s38 = smul.u32 %s37, 1
  %s39 = sshll.u32 %s38, 4
  %40 = dma.done %s20, %s39
  %41 = vsyncmov [#allocation2]
  %s42 = vpop.sfrf %41
  %p43 = scmp.eq.s32.totalorder %s42, 0
  %p44 = pneg %p43
  %46 = shalt.err (%p44)
  %s47 = scalar_lea.sflag [#allocation2], 1
  %48 = vsyncmov %s47
  %s49 = vpop.sfrf %48
  %p50 = scmp.eq.s32.totalorder %s49, 0
  %p51 = pneg %p50
  %53 = shalt.err (%p51)

</llo_original>
